<compile_context>
chip_gen: v7x
topology: tpu7x:2x2x1
jax: 0.10.0
libtpu: 0.0.40
codegen_flags: <defaults>
</compile_context>

<pallas_src>
import functools

import jax
import jax.numpy as jnp
from jax.experimental import pallas as pl
from jax.experimental.pallas import tpu as pltpu

BN_EPS = 1e-5


def _round_up(x, m):
    return (x + m - 1) // m * m


def _conv_stats_kernel(patches_ref, w_ref, y_ref, stats_ref):
    """Pass 1, one M-tile: conv-as-matmul + per-tile per-channel sum / sum-of-squares."""
    y = jnp.dot(patches_ref[...], w_ref[...], preferred_element_type=jnp.float32)
    y_ref[...] = y
    nf_pad = y.shape[1]
    s = jnp.sum(y, axis=0, keepdims=True)          # (1, nf_pad)  per-channel sum
    ss = jnp.sum(y * y, axis=0, keepdims=True)     # (1, nf_pad)  per-channel sum of squares
    # Stats block kept (8, nf_pad) so the output block stays (8,128)-legal:
    # row 0 = sum, row 1 = sum of squares, rows 2..7 = zero padding.
    stats_ref[...] = jnp.concatenate(
        [s, ss, jnp.zeros((6, nf_pad), jnp.float32)], axis=0)


def _bn_relu_kernel(y_ref, scale_ref, shift_ref, o_ref):
    """Pass 2, one M-tile: folded BatchNorm affine (scale/shift) + ReLU, lane-dense."""
    o_ref[...] = jnp.maximum(y_ref[...] * scale_ref[...] + shift_ref[...], 0.0)


@functools.partial(jax.jit,
                   static_argnames=("conv_kernel_size", "block_m", "matmul_dtype"))
def x4_def_conv_block_forward(x, weight, bias, gamma, beta,
                              conv_kernel_size=(4, 4), block_m=512,
                              matmul_dtype=jnp.float32):
    """x: (N, C_in, H, W) f32; weight: (nf, C_in, KH, KW); bias/gamma/beta: (nf,).

    block_m: M-tile rows (use 512-1024 for production sizes; any multiple of 8).
    matmul_dtype: jnp.bfloat16 on v6e/v7x for MXU peak (f32 accumulation is kept).
    """
    # Conv bias is mathematically a no-op under training-mode BatchNorm (it shifts the
    # batch mean and is subtracted back out), so it is dropped to save a VPU pass + DMA.
    del bias

    kh_sz, kw_sz = conv_kernel_size
    N, C, H, W = x.shape
    nf = weight.shape[0]

    # ConstantPad2d((kW//2, kW//2 - 1, 0, 0)): width-only padding.
    pad_l, pad_r = kw_sz // 2, kw_sz // 2 - 1
    H_out = H - kh_sz + 1
    W_out = W + pad_l + pad_r - kw_sz + 1          # == W for kernel_size=(4,4)

    M = N * H_out * W_out
    K = C * kh_sz * kw_sz
    NF_PAD = _round_up(nf, 128)                    # lane-dense output channels
    K_PAD = _round_up(K, 128)                      # full MXU contraction side
    tm = block_m
    M_PAD = _round_up(M, tm)
    num_tiles = M_PAD // tm

    # --- im2col directly in NHWC layout (single concat; no stack+transpose chain). ---
    # Zero-padded rows (M..M_PAD) and columns (K..K_PAD) contribute exactly 0 to both
    # the matmul and the BN statistics, so padding is numerically free.
    # TODO(synk): fold the patch extraction into pass 1 (in-kernel shifted windows /
    # manual DMA) to remove the remaining KH*KW x HBM expansion of the input.
    x_nhwc = jnp.transpose(x, (0, 2, 3, 1)).astype(jnp.float32)          # (N, H, W, C)
    x_nhwc = jnp.pad(x_nhwc, ((0, 0), (0, 0), (pad_l, pad_r), (0, 0)))   # pad W only
    cols = [x_nhwc[:, kh:kh + H_out, kw:kw + W_out, :]
            for kh in range(kh_sz) for kw in range(kw_sz)]
    patches = jnp.concatenate(cols, axis=-1).reshape(M, K)               # (kh, kw, c) order
    patches = jnp.pad(patches, ((0, M_PAD - M), (0, K_PAD - K)))

    # Weight reordered to the same (kh, kw, c) column order; zero-padded to a lane-dense
    # (K_PAD, NF_PAD) tile that stays resident in VMEM across all grid steps.
    w_col = jnp.transpose(weight, (2, 3, 1, 0)).reshape(K, nf).astype(jnp.float32)
    w_col = jnp.pad(w_col, ((0, K_PAD - K), (0, NF_PAD - nf)))

    patches = patches.astype(matmul_dtype)
    w_col = w_col.astype(matmul_dtype)

    cparams = pltpu.CompilerParams(
        dimension_semantics=("parallel",),         # shard M-tiles across v7x's 2 TCs
        vmem_limit_bytes=32 * 1024 * 1024)         # headroom on v7x's 64 MiB VMEM

    # ---------------- Pass 1: tiled matmul + per-tile BN partial statistics ----------
    y_flat, stats = pl.pallas_call(
        _conv_stats_kernel,
        grid=(num_tiles,),
        in_specs=[
            pl.BlockSpec((tm, K_PAD), lambda i: (i, 0)),        # streamed M-tiles
            pl.BlockSpec((K_PAD, NF_PAD), lambda i: (0, 0)),    # resident weights
        ],
        out_specs=(
            pl.BlockSpec((tm, NF_PAD), lambda i: (i, 0)),       # y tile (lane-dense)
            pl.BlockSpec((8, NF_PAD), lambda i: (i, 0)),        # per-tile sum/sumsq
        ),
        out_shape=(
            jax.ShapeDtypeStruct((M_PAD, NF_PAD), jnp.float32),
            jax.ShapeDtypeStruct((num_tiles * 8, NF_PAD), jnp.float32),
        ),
        compiler_params=cparams,
        cost_estimate=pl.CostEstimate(
            flops=2 * M_PAD * K_PAD * NF_PAD,
            transcendentals=0,
            bytes_accessed=4 * (M_PAD * K_PAD + K_PAD * NF_PAD
                                + M_PAD * NF_PAD + num_tiles * 8 * NF_PAD)),
    )(patches, w_col)

    # ---------------- JAX glue: reduce stats, fold BN affine into scale/shift --------
    stats = stats.reshape(num_tiles, 8, NF_PAD)
    total_sum = jnp.sum(stats[:, 0, :], axis=0)
    total_sumsq = jnp.sum(stats[:, 1, :], axis=0)
    denom = jnp.float32(M)                          # real row count (padded rows are 0)
    mean = total_sum / denom
    var = jnp.maximum(total_sumsq / denom - mean * mean, 0.0)   # biased (training BN)
    inv_std = jax.lax.rsqrt(var + BN_EPS)

    g_pad = jnp.pad(gamma.astype(jnp.float32), (0, NF_PAD - nf))
    b_pad = jnp.pad(beta.astype(jnp.float32), (0, NF_PAD - nf))
    scale = (g_pad * inv_std).reshape(1, NF_PAD)
    shift = (b_pad - mean * g_pad * inv_std).reshape(1, NF_PAD)
    # TODO(synk): running_mean/running_var buffer updates (PyTorch training side effect)
    # are not produced by this stateless forward.

    # ---------------- Pass 2: lane-dense elementwise normalize + ReLU ----------------
    out_flat = pl.pallas_call(
        _bn_relu_kernel,
        grid=(num_tiles,),
        in_specs=[
            pl.BlockSpec((tm, NF_PAD), lambda i: (i, 0)),
            pl.BlockSpec((1, NF_PAD), lambda i: (0, 0)),
            pl.BlockSpec((1, NF_PAD), lambda i: (0, 0)),
        ],
        out_specs=pl.BlockSpec((tm, NF_PAD), lambda i: (i, 0)),
        out_shape=jax.ShapeDtypeStruct((M_PAD, NF_PAD), jnp.float32),
        compiler_params=cparams,
        cost_estimate=pl.CostEstimate(
            flops=3 * M_PAD * NF_PAD,
            transcendentals=0,
            bytes_accessed=8 * M_PAD * NF_PAD + 8 * NF_PAD),
    )(y_flat, scale, shift)

    # (M_pad, NF_pad) -> valid (M, nf) -> NHWC -> NCHW only at the module boundary.
    out = out_flat[:M, :nf].reshape(N, H_out, W_out, nf)
    return jnp.transpose(out, (0, 3, 1, 2))


def _reference(x, weight, bias, gamma, beta, conv_kernel_size=(4, 4)):
    """Pure-JAX reference with the conv bias kept (it must cancel under training BN)."""
    kh_sz, kw_sz = conv_kernel_size
    pad_l, pad_r = kw_sz // 2, kw_sz // 2 - 1
    x_pad = jnp.pad(x, ((0, 0), (0, 0), (0, 0), (pad_l, pad_r)))
    y = jax.lax.conv_general_dilated(
        x_pad, weight, window_strides=(1, 1), padding="VALID",
        dimension_numbers=("NCHW", "OIHW", "NCHW"))
    y = y + bias.reshape(1, -1, 1, 1)
    mean = jnp.mean(y, axis=(0, 2, 3), keepdims=True)
    var = jnp.mean((y - mean) ** 2, axis=(0, 2, 3), keepdims=True)
    y = (y - mean) * jax.lax.rsqrt(var + BN_EPS)
    y = y * gamma.reshape(1, -1, 1, 1) + beta.reshape(1, -1, 1, 1)
    return jnp.maximum(y, 0.0)


if __name__ == "__main__":
    # Small shapes consistent with the module.
    N, C_in, H, W = 2, 4, 16, 16
    nf = 8
    kh_sz, kw_sz = 4, 4

    key = jax.random.PRNGKey(0)
    kx, kw_key, kb, kg, kbe = jax.random.split(key, 5)

    x = jax.random.normal(kx, (N, C_in, H, W), dtype=jnp.float32)

    fan_in = C_in * kh_sz * kw_sz
    bound = 1.0 / (fan_in ** 0.5)
    weight = jax.random.uniform(kw_key, (nf, C_in, kh_sz, kw_sz), jnp.float32, -bound, bound)
    bias = jax.random.uniform(kb, (nf,), jnp.float32, -bound, bound)
    gamma = jnp.ones((nf,), jnp.float32) + 0.1 * jax.random.normal(kg, (nf,), jnp.float32)
    beta = 0.1 * jax.random.normal(kbe, (nf,), jnp.float32)

    # block_m=128 so the toy M=416 exercises a real multi-tile grid; default is 512.
    out = x4_def_conv_block_forward(x, weight, bias, gamma, beta,
                                    conv_kernel_size=(kh_sz, kw_sz), block_m=128)
    out = jax.block_until_ready(out)

    ref = _reference(x, weight, bias, gamma, beta, (kh_sz, kw_sz))
    assert out.shape == (N, nf, H - kh_sz + 1, W), out.shape
    max_err = float(jnp.max(jnp.abs(out - ref)))
    assert jnp.allclose(out, ref, atol=1e-4, rtol=1e-4), max_err

    print("KERNEL_OK")
</pallas_src>

<mosaic_0001>
module attributes {stable_mosaic.version = 11 : i64} {
  func.func @_conv_stats_kernel(%arg0: i32, %arg1: memref<128x128xf32, #tpu.memory_space<vmem>>, %arg2: memref<128x128xf32, #tpu.memory_space<vmem>>, %arg3: memref<128x128xf32, #tpu.memory_space<vmem>>, %arg4: memref<8x128xf32, #tpu.memory_space<vmem>>) attributes {dimension_semantics = [#tpu.dimension_semantics<parallel>], iteration_bounds = array<i64: 4>, scalar_prefetch = 0 : i64, scratch_operands = 0 : i64, tpu.core_type = #tpu.core_type<tc>, window_params = [{transform_indices = @transform_0, window_bounds = array<i64: 128, 128>}, {pipeline_mode = #tpu.pipeline_mode<synchronous>, transform_indices = @transform_1, window_bounds = array<i64: 128, 128>}, {transform_indices = @transform_2, window_bounds = array<i64: 128, 128>}, {transform_indices = @transform_3, window_bounds = array<i64: 8, 128>}]} {
    %c0 = arith.constant 0 : index
    %c0_0 = arith.constant 0 : index
    %0 = vector.load %arg1[%c0, %c0_0] : memref<128x128xf32, #tpu.memory_space<vmem>>, vector<128x128xf32>
    %c0_1 = arith.constant 0 : index
    %c0_2 = arith.constant 0 : index
    %1 = vector.load %arg2[%c0_1, %c0_2] : memref<128x128xf32, #tpu.memory_space<vmem>>, vector<128x128xf32>
    %cst = arith.constant dense<0.000000e+00> : vector<128x128xf32>
    %2 = tpu.matmul %0, %1, %cst {dimension_numbers = #tpu.dot_dimension_numbers<[1], [0], [0], [1], [0, 0, 1, 1], [], []>} : vector<128x128xf32>, vector<128x128xf32>, vector<128x128xf32> -> vector<128x128xf32>
    %c0_3 = arith.constant 0 : index
    %c0_4 = arith.constant 0 : index
    %3 = vector.load %arg3[%c0_3, %c0_4] : memref<128x128xf32, #tpu.memory_space<vmem>>, vector<128x128xf32>
    tpu.vector_store %arg3[%c0_3, %c0_4], %2 {strides = array<i32>} : memref<128x128xf32, #tpu.memory_space<vmem>>, vector<128x128xf32>,
    %cst_5 = arith.constant dense<0.000000e+00> : vector<128xf32>
    %4 = vector.multi_reduction <add>, %2, %cst_5 [0] : vector<128x128xf32> to vector<128xf32>
    %5 = vector.shape_cast %4 : vector<128xf32> to vector<1x128xf32>
    %6 = arith.mulf %2, %2 : vector<128x128xf32>
    %cst_6 = arith.constant dense<0.000000e+00> : vector<128xf32>
    %7 = vector.multi_reduction <add>, %6, %cst_6 [0] : vector<128x128xf32> to vector<128xf32>
    %8 = vector.shape_cast %7 : vector<128xf32> to vector<1x128xf32>
    %cst_7 = arith.constant 0.000000e+00 : f32
    %9 = vector.broadcast %cst_7 : f32 to vector<6x128xf32>
    %10 = tpu.concatenate %5, %8, %9 in 0 : vector<1x128xf32>, vector<1x128xf32>, vector<6x128xf32> -> vector<8x128xf32>
    %c0_8 = arith.constant 0 : index
    %c0_9 = arith.constant 0 : index
    %11 = vector.load %arg4[%c0_8, %c0_9] : memref<8x128xf32, #tpu.memory_space<vmem>>, vector<8x128xf32>
    tpu.vector_store %arg4[%c0_8, %c0_9], %10 {strides = array<i32>} : memref<8x128xf32, #tpu.memory_space<vmem>>, vector<8x128xf32>,
    return
  }
  func.func @transform_0(%arg0: i32) -> (i32, i32) {
    %c0_i32 = arith.constant 0 : i32
    %c0_i32_0 = arith.constant 0 : i32
    return %arg0, %c0_i32 : i32, i32
  }
  func.func @transform_1(%arg0: i32) -> (i32, i32) {
    %c0_i32 = arith.constant 0 : i32
    %c0_i32_0 = arith.constant 0 : i32
    %c0_i32_1 = arith.constant 0 : i32
    return %c0_i32, %c0_i32_0 : i32, i32
  }
  func.func @transform_2(%arg0: i32) -> (i32, i32) {
    %c0_i32 = arith.constant 0 : i32
    %c0_i32_0 = arith.constant 0 : i32
    return %arg0, %c0_i32 : i32, i32
  }
  func.func @transform_3(%arg0: i32) -> (i32, i32) {
    %c0_i32 = arith.constant 0 : i32
    %c0_i32_0 = arith.constant 0 : i32
    return %arg0, %c0_i32 : i32, i32
  }
}

module attributes {stable_mosaic.version = 11 : i64} {
  func.func @_bn_relu_kernel(%arg0: i32, %arg1: memref<128x128xf32, #tpu.memory_space<vmem>>, %arg2: memref<1x128xf32, #tpu.memory_space<vmem>>, %arg3: memref<1x128xf32, #tpu.memory_space<vmem>>, %arg4: memref<128x128xf32, #tpu.memory_space<vmem>>) attributes {dimension_semantics = [#tpu.dimension_semantics<parallel>], iteration_bounds = array<i64: 4>, scalar_prefetch = 0 : i64, scratch_operands = 0 : i64, tpu.core_type = #tpu.core_type<tc>, window_params = [{transform_indices = @transform_0, window_bounds = array<i64: 128, 128>}, {pipeline_mode = #tpu.pipeline_mode<synchronous>, transform_indices = @transform_1, window_bounds = array<i64: 1, 128>}, {pipeline_mode = #tpu.pipeline_mode<synchronous>, transform_indices = @transform_2, window_bounds = array<i64: 1, 128>}, {transform_indices = @transform_3, window_bounds = array<i64: 128, 128>}]} {
    %c0 = arith.constant 0 : index
    %c0_0 = arith.constant 0 : index
    %0 = vector.load %arg1[%c0, %c0_0] : memref<128x128xf32, #tpu.memory_space<vmem>>, vector<128x128xf32>
    %c0_1 = arith.constant 0 : index
    %c0_2 = arith.constant 0 : index
    %1 = vector.load %arg2[%c0_1, %c0_2] : memref<1x128xf32, #tpu.memory_space<vmem>>, vector<1x128xf32>
    %2 = vector.broadcast %1 : vector<1x128xf32> to vector<128x128xf32>
    %3 = arith.mulf %0, %2 : vector<128x128xf32>
    %c0_3 = arith.constant 0 : index
    %c0_4 = arith.constant 0 : index
    %4 = vector.load %arg3[%c0_3, %c0_4] : memref<1x128xf32, #tpu.memory_space<vmem>>, vector<1x128xf32>
    %5 = vector.broadcast %4 : vector<1x128xf32> to vector<128x128xf32>
    %6 = arith.addf %3, %5 : vector<128x128xf32>
    %cst = arith.constant 0.000000e+00 : f32
    %7 = vector.broadcast %cst : f32 to vector<128x128xf32>
    %8 = arith.maximumf %6, %7 : vector<128x128xf32>
    %c0_5 = arith.constant 0 : index
    %c0_6 = arith.constant 0 : index
    %9 = vector.load %arg4[%c0_5, %c0_6] : memref<128x128xf32, #tpu.memory_space<vmem>>, vector<128x128xf32>
    tpu.vector_store %arg4[%c0_5, %c0_6], %8 {strides = array<i32>} : memref<128x128xf32, #tpu.memory_space<vmem>>, vector<128x128xf32>,
    return
  }
  func.func @transform_0(%arg0: i32) -> (i32, i32) {
    %c0_i32 = arith.constant 0 : i32
    %c0_i32_0 = arith.constant 0 : i32
    return %arg0, %c0_i32 : i32, i32
  }
  func.func @transform_1(%arg0: i32) -> (i32, i32) {
    %c0_i32 = arith.constant 0 : i32
    %c0_i32_0 = arith.constant 0 : i32
    %c0_i32_1 = arith.constant 0 : i32
    return %c0_i32, %c0_i32_0 : i32, i32
  }
  func.func @transform_2(%arg0: i32) -> (i32, i32) {
    %c0_i32 = arith.constant 0 : i32
    %c0_i32_0 = arith.constant 0 : i32
    %c0_i32_1 = arith.constant 0 : i32
    return %c0_i32, %c0_i32_0 : i32, i32
  }
  func.func @transform_3(%arg0: i32) -> (i32, i32) {
    %c0_i32 = arith.constant 0 : i32
    %c0_i32_0 = arith.constant 0 : i32
    return %arg0, %c0_i32 : i32, i32
  }
}

</mosaic_0001>

<llo_original>
// kernel: x4_def_conv_block_forward.3
$region0: #{x4_def_conv_block_forward.3}
  #allocation0 [shape = 'u32[]', space=smem, size = 0x4, offset = 0x4, fixed_abs, tag = 'smem constant byte address 0x4 - core index']
  #allocation1 [shape = 'u32[144,128]{1,0:T(1,128)}', space=vmem, size = 0x12000, scoped, tag = 'internal scratch']
  %s0 = inlined_call_operand.vmem [shape: f32[512,128], index: 0, kind: input, shape index: {}]
  %s1 = inlined_call_operand.vmem [shape: f32[1,128], index: 1, kind: input, shape index: {}]
  %s2 = inlined_call_operand.vmem [shape: f32[1,128], index: 2, kind: input, shape index: {}]
  %s3 = inlined_call_operand.vmem [shape: f32[512,128], index: 3, kind: output, shape index: {}]
  %s4 = sld [smem:[#allocation0]]
  $region45: #{x4_def_conv_block_forward.3} parent=0
    _
  %s6 = ssub.s32 1, %s4
  %s7 = scalar_select 0, %s6, %s4
  loop: start=0, step=1, limit=6
  $region2: #{x4_def_conv_block_forward.3} parent=0 // loop_pre_header
    _
  $region3: #{x4_def_conv_block_forward.3} parent=0 // loop_header
    %s9 = sphi 0, %s13
    %p10 = scmp.ge.s32.totalorder %s9, 6
    %s19 = sphi 0, %s21
    %s22 = sphi 0, %s19
    %s23 = sphi 0, %s22
    %s39 = sphi 0, %s23
    %s43 = sphi 0, %s43
    %s45 = sphi 0, %s43
    %s46 = sphi 0, %s45
    %s60 = sphi 0, %s46
    %s64 = sphi 0, %s64
    %s66 = sphi 0, %s64
    %s67 = sphi 0, %s66
    %s81 = sphi 0, %s67
    %s87 = sphi 0, %s89
    %s90 = sphi 0, %s87
    %s91 = sphi 0, %s90
    %s107 = sphi 0, %s91
  $region4: #{x4_def_conv_block_forward.3} parent=0 // loop_header_branch
    %12 = sbr.rel (%p10) target = $region8
  $region5: #{x4_def_conv_block_forward.3} parent=0 // loop_body
    %s14 = ssub.s32 %s9, 1
    %s15 = ssub.s32 %s9, 2
    %s16 = sadd.s32 %s9, 1
    %s17 = ssub.s32 %s9, %s16
    %p18 = scmp.eq.s32.totalorder %s17, 0
    %s20 = sadd.s32 %s19, 1
    %s21 = scalar_select %p18, %s19, %s20
    %p24 = pneg %p18
    %p25 = scmp.eq.s32.totalorder %s9, 3
    %p26 = por %p24, %p25
    %p27 = scmp.ne.s32.totalorder %s19, %s22
    %p28 = scmp.eq.s32.totalorder %s9, 0
    %p29 = por %p27, %p28
    %p30 = scmp.ne.s32.totalorder %s19, %s22
    %p31 = scmp.eq.s32.totalorder %s14, 3
    %p32 = por %p30, %p31
    %p33 = scmp.ne.s32.totalorder %s22, %s23
    %p34 = scmp.eq.s32.totalorder %s14, 0
    %p35 = por %p33, %p34
    %p36 = scmp.ne.s32.totalorder %s22, %s23
    %p37 = scmp.eq.s32.totalorder %s15, 3
    %p38 = por %p36, %p37
    %p40 = scmp.ne.s32.totalorder %s23, %s39
    %p41 = scmp.eq.s32.totalorder %s15, 0
    %p42 = por %p40, %p41
    %s44 = sadd.s32 %s43, 1
    %p47 = scmp.eq.s32.totalorder %s9, 3
    %p48 = scmp.ne.s32.totalorder %s43, %s45
    %p49 = scmp.eq.s32.totalorder %s9, 0
    %p50 = por %p48, %p49
    %p51 = scmp.ne.s32.totalorder %s43, %s45
    %p52 = scmp.eq.s32.totalorder %s14, 3
    %p53 = por %p51, %p52
    %p54 = scmp.ne.s32.totalorder %s45, %s46
    %p55 = scmp.eq.s32.totalorder %s14, 0
    %p56 = por %p54, %p55
    %p57 = scmp.ne.s32.totalorder %s45, %s46
    %p58 = scmp.eq.s32.totalorder %s15, 3
    %p59 = por %p57, %p58
    %p61 = scmp.ne.s32.totalorder %s46, %s60
    %p62 = scmp.eq.s32.totalorder %s15, 0
    %p63 = por %p61, %p62
    %s65 = sadd.s32 %s64, 1
    %p68 = scmp.eq.s32.totalorder %s9, 3
    %p69 = scmp.ne.s32.totalorder %s64, %s66
    %p70 = scmp.eq.s32.totalorder %s9, 0
    %p71 = por %p69, %p70
    %p72 = scmp.ne.s32.totalorder %s64, %s66
    %p73 = scmp.eq.s32.totalorder %s14, 3
    %p74 = por %p72, %p73
    %p75 = scmp.ne.s32.totalorder %s66, %s67
    %p76 = scmp.eq.s32.totalorder %s14, 0
    %p77 = por %p75, %p76
    %p78 = scmp.ne.s32.totalorder %s66, %s67
    %p79 = scmp.eq.s32.totalorder %s15, 3
    %p80 = por %p78, %p79
    %p82 = scmp.ne.s32.totalorder %s67, %s81
    %p83 = scmp.eq.s32.totalorder %s15, 0
    %p84 = por %p82, %p83
    %s85 = ssub.s32 %s9, %s16
    %p86 = scmp.eq.s32.totalorder %s85, 0
    %s88 = sadd.s32 %s87, 1
    %s89 = scalar_select %p86, %s87, %s88
    %p92 = pneg %p86
    %p93 = scmp.eq.s32.totalorder %s9, 3
    %p94 = por %p92, %p93
    %p95 = scmp.ne.s32.totalorder %s87, %s90
    %p96 = scmp.eq.s32.totalorder %s9, 0
    %p97 = por %p95, %p96
    %p98 = scmp.ne.s32.totalorder %s87, %s90
    %p99 = scmp.eq.s32.totalorder %s14, 3
    %p100 = por %p98, %p99
    %p101 = scmp.ne.s32.totalorder %s90, %s91
    %p102 = scmp.eq.s32.totalorder %s14, 0
    %p103 = por %p101, %p102
    %p104 = scmp.ne.s32.totalorder %s90, %s91
    %p105 = scmp.eq.s32.totalorder %s15, 3
    %p106 = por %p104, %p105
    %p108 = scmp.ne.s32.totalorder %s91, %s107
    %p109 = scmp.eq.s32.totalorder %s15, 0
    %p110 = por %p108, %p109
    %p111 = scmp.le.s32.totalorder 1, %s9
    %p112 = scmp.lt.s32.totalorder %s9, 5
    %p113 = pnand %p111, %p112
    %p114 = pneg %p113
    // Predicated region
    $region9: #{x4_def_conv_block_forward.3} parent=5 // pred_check
      _
    $region10: #{x4_def_conv_block_forward.3} parent=5 // pred_check_branch
      %116 = sbr.rel (%p113) target = $region12
    $region11: #{x4_def_conv_block_forward.3} parent=5 // pred_region
      %s117 = ssub.s32 %s9, 1
      // Predicated region
      $region13: #{x4_def_conv_block_forward.3} parent=11 // pred_check
        %p118 = pneg %p56
      $region14: #{x4_def_conv_block_forward.3} parent=11 // pred_check_branch
        %120 = sbr.rel (%p118) target = $region16
      $region15: #{x4_def_conv_block_forward.3} parent=11 // pred_region
        _
      $region16: #{x4_def_conv_block_forward.3} parent=11 // pred_fallthru
        _
      // Predicated region
      $region17: #{x4_def_conv_block_forward.3} parent=11 // pred_check
        %p121 = pneg %p77
      $region18: #{x4_def_conv_block_forward.3} parent=11 // pred_check_branch
        %123 = sbr.rel (%p121) target = $region20
      $region19: #{x4_def_conv_block_forward.3} parent=11 // pred_region
        _
      $region20: #{x4_def_conv_block_forward.3} parent=11 // pred_fallthru
        _
    $region12: #{x4_def_conv_block_forward.3} parent=5 // pred_fallthru
      _
    %p124 = scmp.lt.s32.totalorder %s9, 4
    // Predicated region
    $region21: #{x4_def_conv_block_forward.3} parent=5 // pred_check
      %p125 = pneg %p124
    $region22: #{x4_def_conv_block_forward.3} parent=5 // pred_check_branch
      %127 = sbr.rel (%p125) target = $region24
    $region23: #{x4_def_conv_block_forward.3} parent=5 // pred_region
      // Predicated region
      $region25: #{x4_def_conv_block_forward.3} parent=23 // pred_check
        %p128 = pneg %p29
      $region26: #{x4_def_conv_block_forward.3} parent=23 // pred_check_branch
        %130 = sbr.rel (%p128) target = $region28
      $region27: #{x4_def_conv_block_forward.3} parent=23 // pred_region
        %s131 = smul.u32 16, %s9
        %p132 = scmp.lt.s32.totalorder %s131, 63
        %s133 = scalar_select %p132, %s131, 63
        %s134 = smul.addr %s133, 8
        %s135 = scalar_lea.vmem %s0, %s134
        %s136 = smul.u32 16, %s9
      $region28: #{x4_def_conv_block_forward.3} parent=23 // pred_fallthru
        _
    $region24: #{x4_def_conv_block_forward.3} parent=5 // pred_fallthru
      _
    %p137 = scmp.le.s32.totalorder 1, %s9
    %p138 = scmp.lt.s32.totalorder %s9, 5
    %p139 = pnand %p137, %p138
    %p140 = pneg %p139
    // Predicated region
    $region29: #{x4_def_conv_block_forward.3} parent=5 // pred_check
      _
    $region30: #{x4_def_conv_block_forward.3} parent=5 // pred_check_branch
      %142 = sbr.rel (%p139) target = $region32
    $region31: #{x4_def_conv_block_forward.3} parent=5 // pred_region
      %s143 = ssub.s32 %s9, 1
      %s144 = smul.u32 16, %s14
      %p145 = scmp.lt.s32.totalorder %s144, 63
      %s146 = scalar_select %p145, %s144, 63
      %s147 = smul.addr %s146, 8
      %s148 = scalar_lea.vmem %s0, %s147
      %p149 = pneg %p35
      %p150 = pneg %p32
      %p151 = pneg %p56
      %p152 = pneg %p53
      %p153 = pneg %p77
      %p154 = pneg %p74
      %p155 = pneg %p103
      %p156 = pneg %p100
      %s157 = smul.u32 16, %s14
      %p158 = scmp.lt.s32.totalorder %s157, 63
      %s159 = scalar_select %p158, %s157, 63
      %s160 = smul.addr %s159, 8
      %s161 = scalar_lea.vmem %s3, %s160
      %s162 = smul.u32 16, %s14
      %p163 = scmp.lt.s32.totalorder %s162, 63
      %s164 = scalar_select %p163, %s162, 63
      %s165 = smul.addr %s164, 8
      %s166 = scalar_lea.vmem %s0, %s165
      %s167 = smul.u32 16, %s14
      %s168 = smul.u32 16, %s14
      %p169 = scmp.lt.s32.totalorder %s168, 63
      %s170 = scalar_select %p169, %s168, 63
      %s171 = smul.addr %s170, 8
      %s172 = scalar_lea.vmem %s3, %s171
      %s173 = smul.u32 16, %s14
      %v174 = vld [vmem:[%s166] sm:$0xff]
      %v175 = vld [vmem:[%s166 + $0x8] sm:$0xff]
      %v176 = vld [vmem:[%s166 + $0x10] sm:$0xff]
      %v177 = vld [vmem:[%s166 + $0x18] sm:$0xff]
      %v178 = vld [vmem:[%s166 + $0x20] sm:$0xff]
      %v179 = vld [vmem:[%s166 + $0x28] sm:$0xff]
      %v180 = vld [vmem:[%s166 + $0x30] sm:$0xff]
      %v181 = vld [vmem:[%s166 + $0x38] sm:$0xff]
      %v182 = vld [vmem:[%s166 + $0x40] sm:$0xff]
      %v183 = vld [vmem:[%s166 + $0x48] sm:$0xff]
      %v184 = vld [vmem:[%s166 + $0x50] sm:$0xff]
      %v185 = vld [vmem:[%s166 + $0x58] sm:$0xff]
      %v186 = vld [vmem:[%s166 + $0x60] sm:$0xff]
      %v187 = vld [vmem:[%s166 + $0x68] sm:$0xff]
      %v188 = vld [vmem:[%s166 + $0x70] sm:$0xff]
      %v189 = vld [vmem:[%s166 + $0x78] sm:$0xff]
      %v190 = vld [vmem:[%s1] sm:$0x1]
      %v192 = vlaneseq
      %v193 = vshrl.u32 %v192, 7
      %v194 = vsub.s32 0, %v193
      %v195 = vrot.slane %v190, %v194
      %v197 = vmul.f32 %v174, %v195
      %v198 = vmul.f32 %v175, %v195
      %v199 = vmul.f32 %v176, %v195
      %v200 = vmul.f32 %v177, %v195
      %v201 = vmul.f32 %v178, %v195
      %v202 = vmul.f32 %v179, %v195
      %v203 = vmul.f32 %v180, %v195
      %v204 = vmul.f32 %v181, %v195
      %v205 = vmul.f32 %v182, %v195
      %v206 = vmul.f32 %v183, %v195
      %v207 = vmul.f32 %v184, %v195
      %v208 = vmul.f32 %v185, %v195
      %v209 = vmul.f32 %v186, %v195
      %v210 = vmul.f32 %v187, %v195
      %v211 = vmul.f32 %v188, %v195
      %v212 = vmul.f32 %v189, %v195
      %v213 = vld [vmem:[%s2] sm:$0x1]
      %v215 = vlaneseq
      %v216 = vshrl.u32 %v215, 7
      %v217 = vsub.s32 0, %v216
      %v218 = vrot.slane %v213, %v217
      %v220 = vadd.f32 %v197, %v218
      %v221 = vadd.f32 %v198, %v218
      %v222 = vadd.f32 %v199, %v218
      %v223 = vadd.f32 %v200, %v218
      %v224 = vadd.f32 %v201, %v218
      %v225 = vadd.f32 %v202, %v218
      %v226 = vadd.f32 %v203, %v218
      %v227 = vadd.f32 %v204, %v218
      %v228 = vadd.f32 %v205, %v218
      %v229 = vadd.f32 %v206, %v218
      %v230 = vadd.f32 %v207, %v218
      %v231 = vadd.f32 %v208, %v218
      %v232 = vadd.f32 %v209, %v218
      %v233 = vadd.f32 %v210, %v218
      %v234 = vadd.f32 %v211, %v218
      %v235 = vadd.f32 %v212, %v218
      %v236 = vmax.f32 %v220, 0.0
      %v237 = vmax.f32 %v221, 0.0
      %v238 = vmax.f32 %v222, 0.0
      %v239 = vmax.f32 %v223, 0.0
      %v240 = vmax.f32 %v224, 0.0
      %v241 = vmax.f32 %v225, 0.0
      %v242 = vmax.f32 %v226, 0.0
      %v243 = vmax.f32 %v227, 0.0
      %v244 = vmax.f32 %v228, 0.0
      %v245 = vmax.f32 %v229, 0.0
      %v246 = vmax.f32 %v230, 0.0
      %v247 = vmax.f32 %v231, 0.0
      %v248 = vmax.f32 %v232, 0.0
      %v249 = vmax.f32 %v233, 0.0
      %v250 = vmax.f32 %v234, 0.0
      %v251 = vmax.f32 %v235, 0.0
      %252 = vst [vmem:[%s172] sm:$0xff] %v236
      %253 = vst [vmem:[%s172 + $0x8] sm:$0xff] %v237
      %254 = vst [vmem:[%s172 + $0x10] sm:$0xff] %v238
      %255 = vst [vmem:[%s172 + $0x18] sm:$0xff] %v239
      %256 = vst [vmem:[%s172 + $0x20] sm:$0xff] %v240
      %257 = vst [vmem:[%s172 + $0x28] sm:$0xff] %v241
      %258 = vst [vmem:[%s172 + $0x30] sm:$0xff] %v242
      %259 = vst [vmem:[%s172 + $0x38] sm:$0xff] %v243
      %260 = vst [vmem:[%s172 + $0x40] sm:$0xff] %v244
      %261 = vst [vmem:[%s172 + $0x48] sm:$0xff] %v245
      %262 = vst [vmem:[%s172 + $0x50] sm:$0xff] %v246
      %263 = vst [vmem:[%s172 + $0x58] sm:$0xff] %v247
      %264 = vst [vmem:[%s172 + $0x60] sm:$0xff] %v248
      %265 = vst [vmem:[%s172 + $0x68] sm:$0xff] %v249
      %266 = vst [vmem:[%s172 + $0x70] sm:$0xff] %v250
      %267 = vst [vmem:[%s172 + $0x78] sm:$0xff] %v251
      %s268 = smul.u32 16, %s14
      %p269 = scmp.lt.s32.totalorder %s268, 63
      %s270 = scalar_select %p269, %s268, 63
      %s271 = smul.addr %s270, 8
      %s272 = scalar_lea.vmem %s3, %s271
      // Predicated region
      $region33: #{x4_def_conv_block_forward.3} parent=31 // pred_check
        %p273 = pneg %p100
      $region34: #{x4_def_conv_block_forward.3} parent=31 // pred_check_branch
        %275 = sbr.rel (%p273) target = $region36
      $region35: #{x4_def_conv_block_forward.3} parent=31 // pred_region
        %s276 = smul.u32 16, %s14
      $region36: #{x4_def_conv_block_forward.3} parent=31 // pred_fallthru
        _
    $region32: #{x4_def_conv_block_forward.3} parent=5 // pred_fallthru
      _
    %p277 = scmp.le.s32.totalorder 2, %s9
    // Predicated region
    $region37: #{x4_def_conv_block_forward.3} parent=5 // pred_check
      %p278 = pneg %p277
    $region38: #{x4_def_conv_block_forward.3} parent=5 // pred_check_branch
      %280 = sbr.rel (%p278) target = $region40
    $region39: #{x4_def_conv_block_forward.3} parent=5 // pred_region
      %s281 = ssub.s32 %s9, 2
      // Predicated region
      $region41: #{x4_def_conv_block_forward.3} parent=39 // pred_check
        %p282 = pneg %p106
      $region42: #{x4_def_conv_block_forward.3} parent=39 // pred_check_branch
        %284 = sbr.rel (%p282) target = $region44
      $region43: #{x4_def_conv_block_forward.3} parent=39 // pred_region
        %s285 = smul.u32 16, %s15
        %p286 = scmp.lt.s32.totalorder %s285, 63
        %s287 = scalar_select %p286, %s285, 63
        %s288 = smul.addr %s287, 8
        %s289 = scalar_lea.vmem %s3, %s288
      $region44: #{x4_def_conv_block_forward.3} parent=39 // pred_fallthru
        _
    $region40: #{x4_def_conv_block_forward.3} parent=5 // pred_fallthru
      _
  $region6: #{x4_def_conv_block_forward.3} parent=0 // loop_footer
    %s13 = sadd.s32 1, %s9
  $region7: #{x4_def_conv_block_forward.3} parent=0 // loop_footer_branch
    %8 = sbr.rel target = $region3
  $region8: #{x4_def_conv_block_forward.3} parent=0 // loop_exit
    _

// kernel: x4_def_conv_block_forward.2
$region0: #{x4_def_conv_block_forward.2}
  #allocation0 [shape = 'u32[]', space=smem, size = 0x4, offset = 0x4, fixed_abs, tag = 'smem constant byte address 0x4 - core index']
  #allocation1 [shape = 'u32[144,128]{1,0:T(1,128)}', space=vmem, size = 0x12000, scoped, tag = 'internal scratch']
  %s0 = inlined_call_operand.vmem [shape: f32[512,128], index: 0, kind: input, shape index: {}]
  %s1 = inlined_call_operand.vmem [shape: f32[128,128], index: 1, kind: input, shape index: {}]
  %s2 = inlined_call_operand.vmem [shape: f32[512,128], index: 2, kind: output, shape index: {0}]
  %s3 = inlined_call_operand.vmem [shape: f32[32,128], index: 3, kind: output, shape index: {1}]
  %4 = xla_tuple %s2, %s3
  %s5 = sld [smem:[#allocation0]]
  $region49: #{x4_def_conv_block_forward.2} parent=0
    _
  %s7 = ssub.s32 1, %s5
  %s8 = scalar_select 0, %s7, %s5
  loop: start=0, step=1, limit=6
  $region2: #{x4_def_conv_block_forward.2} parent=0 // loop_pre_header
    _
  $region3: #{x4_def_conv_block_forward.2} parent=0 // loop_header
    %s10 = sphi 0, %s14
    %p11 = scmp.ge.s32.totalorder %s10, 6
    %s20 = sphi 0, %s22
    %s23 = sphi 0, %s20
    %s24 = sphi 0, %s23
    %s40 = sphi 0, %s24
    %s44 = sphi 0, %s44
    %s46 = sphi 0, %s44
    %s47 = sphi 0, %s46
    %s61 = sphi 0, %s47
    %s67 = sphi 0, %s69
    %s70 = sphi 0, %s67
    %s71 = sphi 0, %s70
    %s87 = sphi 0, %s71
    %s93 = sphi 0, %s95
    %s96 = sphi 0, %s93
    %s97 = sphi 0, %s96
    %s113 = sphi 0, %s97
  $region4: #{x4_def_conv_block_forward.2} parent=0 // loop_header_branch
    %13 = sbr.rel (%p11) target = $region8
  $region5: #{x4_def_conv_block_forward.2} parent=0 // loop_body
    %s15 = ssub.s32 %s10, 1
    %s16 = ssub.s32 %s10, 2
    %s17 = sadd.s32 %s10, 1
    %s18 = ssub.s32 %s10, %s17
    %p19 = scmp.eq.s32.totalorder %s18, 0
    %s21 = sadd.s32 %s20, 1
    %s22 = scalar_select %p19, %s20, %s21
    %p25 = pneg %p19
    %p26 = scmp.eq.s32.totalorder %s10, 3
    %p27 = por %p25, %p26
    %p28 = scmp.ne.s32.totalorder %s20, %s23
    %p29 = scmp.eq.s32.totalorder %s10, 0
    %p30 = por %p28, %p29
    %p31 = scmp.ne.s32.totalorder %s20, %s23
    %p32 = scmp.eq.s32.totalorder %s15, 3
    %p33 = por %p31, %p32
    %p34 = scmp.ne.s32.totalorder %s23, %s24
    %p35 = scmp.eq.s32.totalorder %s15, 0
    %p36 = por %p34, %p35
    %p37 = scmp.ne.s32.totalorder %s23, %s24
    %p38 = scmp.eq.s32.totalorder %s16, 3
    %p39 = por %p37, %p38
    %p41 = scmp.ne.s32.totalorder %s24, %s40
    %p42 = scmp.eq.s32.totalorder %s16, 0
    %p43 = por %p41, %p42
    %s45 = sadd.s32 %s44, 1
    %p48 = scmp.eq.s32.totalorder %s10, 3
    %p49 = scmp.ne.s32.totalorder %s44, %s46
    %p50 = scmp.eq.s32.totalorder %s10, 0
    %p51 = por %p49, %p50
    %p52 = scmp.ne.s32.totalorder %s44, %s46
    %p53 = scmp.eq.s32.totalorder %s15, 3
    %p54 = por %p52, %p53
    %p55 = scmp.ne.s32.totalorder %s46, %s47
    %p56 = scmp.eq.s32.totalorder %s15, 0
    %p57 = por %p55, %p56
    %p58 = scmp.ne.s32.totalorder %s46, %s47
    %p59 = scmp.eq.s32.totalorder %s16, 3
    %p60 = por %p58, %p59
    %p62 = scmp.ne.s32.totalorder %s47, %s61
    %p63 = scmp.eq.s32.totalorder %s16, 0
    %p64 = por %p62, %p63
    %s65 = ssub.s32 %s10, %s17
    %p66 = scmp.eq.s32.totalorder %s65, 0
    %s68 = sadd.s32 %s67, 1
    %s69 = scalar_select %p66, %s67, %s68
    %p72 = pneg %p66
    %p73 = scmp.eq.s32.totalorder %s10, 3
    %p74 = por %p72, %p73
    %p75 = scmp.ne.s32.totalorder %s67, %s70
    %p76 = scmp.eq.s32.totalorder %s10, 0
    %p77 = por %p75, %p76
    %p78 = scmp.ne.s32.totalorder %s67, %s70
    %p79 = scmp.eq.s32.totalorder %s15, 3
    %p80 = por %p78, %p79
    %p81 = scmp.ne.s32.totalorder %s70, %s71
    %p82 = scmp.eq.s32.totalorder %s15, 0
    %p83 = por %p81, %p82
    %p84 = scmp.ne.s32.totalorder %s70, %s71
    %p85 = scmp.eq.s32.totalorder %s16, 3
    %p86 = por %p84, %p85
    %p88 = scmp.ne.s32.totalorder %s71, %s87
    %p89 = scmp.eq.s32.totalorder %s16, 0
    %p90 = por %p88, %p89
    %s91 = ssub.s32 %s10, %s17
    %p92 = scmp.eq.s32.totalorder %s91, 0
    %s94 = sadd.s32 %s93, 1
    %s95 = scalar_select %p92, %s93, %s94
    %p98 = pneg %p92
    %p99 = scmp.eq.s32.totalorder %s10, 3
    %p100 = por %p98, %p99
    %p101 = scmp.ne.s32.totalorder %s93, %s96
    %p102 = scmp.eq.s32.totalorder %s10, 0
    %p103 = por %p101, %p102
    %p104 = scmp.ne.s32.totalorder %s93, %s96
    %p105 = scmp.eq.s32.totalorder %s15, 3
    %p106 = por %p104, %p105
    %p107 = scmp.ne.s32.totalorder %s96, %s97
    %p108 = scmp.eq.s32.totalorder %s15, 0
    %p109 = por %p107, %p108
    %p110 = scmp.ne.s32.totalorder %s96, %s97
    %p111 = scmp.eq.s32.totalorder %s16, 3
    %p112 = por %p110, %p111
    %p114 = scmp.ne.s32.totalorder %s97, %s113
    %p115 = scmp.eq.s32.totalorder %s16, 0
    %p116 = por %p114, %p115
    %p117 = scmp.le.s32.totalorder 1, %s10
    %p118 = scmp.lt.s32.totalorder %s10, 5
    %p119 = pnand %p117, %p118
    %p120 = pneg %p119
    // Predicated region
    $region9: #{x4_def_conv_block_forward.2} parent=5 // pred_check
      _
    $region10: #{x4_def_conv_block_forward.2} parent=5 // pred_check_branch
      %122 = sbr.rel (%p119) target = $region12
    $region11: #{x4_def_conv_block_forward.2} parent=5 // pred_region
      %s123 = ssub.s32 %s10, 1
      // Predicated region
      $region13: #{x4_def_conv_block_forward.2} parent=11 // pred_check
        %p124 = pneg %p57
      $region14: #{x4_def_conv_block_forward.2} parent=11 // pred_check_branch
        %126 = sbr.rel (%p124) target = $region16
      $region15: #{x4_def_conv_block_forward.2} parent=11 // pred_region
        _
      $region16: #{x4_def_conv_block_forward.2} parent=11 // pred_fallthru
        _
    $region12: #{x4_def_conv_block_forward.2} parent=5 // pred_fallthru
      _
    %p127 = scmp.lt.s32.totalorder %s10, 4
    // Predicated region
    $region17: #{x4_def_conv_block_forward.2} parent=5 // pred_check
      %p128 = pneg %p127
    $region18: #{x4_def_conv_block_forward.2} parent=5 // pred_check_branch
      %130 = sbr.rel (%p128) target = $region20
    $region19: #{x4_def_conv_block_forward.2} parent=5 // pred_region
      // Predicated region
      $region21: #{x4_def_conv_block_forward.2} parent=19 // pred_check
        %p131 = pneg %p30
      $region22: #{x4_def_conv_block_forward.2} parent=19 // pred_check_branch
        %133 = sbr.rel (%p131) target = $region24
      $region23: #{x4_def_conv_block_forward.2} parent=19 // pred_region
        %s134 = smul.u32 16, %s10
        %p135 = scmp.lt.s32.totalorder %s134, 63
        %s136 = scalar_select %p135, %s134, 63
        %s137 = smul.addr %s136, 8
        %s138 = scalar_lea.vmem %s0, %s137
        %s139 = smul.u32 16, %s10
      $region24: #{x4_def_conv_block_forward.2} parent=19 // pred_fallthru
        _
    $region20: #{x4_def_conv_block_forward.2} parent=5 // pred_fallthru
      _
    %p140 = scmp.le.s32.totalorder 1, %s10
    %p141 = scmp.lt.s32.totalorder %s10, 5
    %p142 = pnand %p140, %p141
    %p143 = pneg %p142
    // Predicated region
    $region25: #{x4_def_conv_block_forward.2} parent=5 // pred_check
      _
    $region26: #{x4_def_conv_block_forward.2} parent=5 // pred_check_branch
      %145 = sbr.rel (%p142) target = $region28
    $region27: #{x4_def_conv_block_forward.2} parent=5 // pred_region
      %s146 = ssub.s32 %s10, 1
      %s147 = smul.u32 16, %s15
      %p148 = scmp.lt.s32.totalorder %s147, 63
      %s149 = scalar_select %p148, %s147, 63
      %s150 = smul.addr %s149, 8
      %s151 = scalar_lea.vmem %s0, %s150
      %p152 = pneg %p36
      %p153 = pneg %p33
      %p154 = pneg %p57
      %p155 = pneg %p54
      %p156 = pneg %p83
      %p157 = pneg %p80
      %s158 = smul.u32 16, %s15
      %p159 = scmp.lt.s32.totalorder %s158, 63
      %s160 = scalar_select %p159, %s158, 63
      %s161 = smul.addr %s160, 8
      %s162 = scalar_lea.vmem %s2, %s161
      %p163 = pneg %p109
      %p164 = pneg %p106
      %p165 = scmp.lt.s32.totalorder %s15, 3
      %s166 = scalar_select %p165, %s15, 3
      %s167 = smul.addr %s166, 8
      %s168 = scalar_lea.vmem %s3, %s167
      %s169 = smul.u32 16, %s15
      %p170 = scmp.lt.s32.totalorder %s169, 63
      %s171 = scalar_select %p170, %s169, 63
      %s172 = smul.addr %s171, 8
      %s173 = scalar_lea.vmem %s0, %s172
      %s174 = smul.u32 16, %s15
      %s175 = smul.u32 16, %s15
      %p176 = scmp.lt.s32.totalorder %s175, 63
      %s177 = scalar_select %p176, %s175, 63
      %s178 = smul.addr %s177, 8
      %s179 = scalar_lea.vmem %s2, %s178
      %s180 = smul.u32 16, %s15
      %p181 = scmp.lt.s32.totalorder %s15, 3
      %s182 = scalar_select %p181, %s15, 3
      %s183 = smul.addr %s182, 8
      %s184 = scalar_lea.vmem %s3, %s183
      %v185 = vld [vmem:[%s173] sm:$0xff]
      %v186 = vld [vmem:[%s173 + $0x8] sm:$0xff]
      %v187 = vld [vmem:[%s173 + $0x10] sm:$0xff]
      %v188 = vld [vmem:[%s173 + $0x18] sm:$0xff]
      %v189 = vld [vmem:[%s173 + $0x20] sm:$0xff]
      %v190 = vld [vmem:[%s173 + $0x28] sm:$0xff]
      %v191 = vld [vmem:[%s173 + $0x30] sm:$0xff]
      %v192 = vld [vmem:[%s173 + $0x38] sm:$0xff]
      %v193 = vld [vmem:[%s173 + $0x40] sm:$0xff]
      %v194 = vld [vmem:[%s173 + $0x48] sm:$0xff]
      %v195 = vld [vmem:[%s173 + $0x50] sm:$0xff]
      %v196 = vld [vmem:[%s173 + $0x58] sm:$0xff]
      %v197 = vld [vmem:[%s173 + $0x60] sm:$0xff]
      %v198 = vld [vmem:[%s173 + $0x68] sm:$0xff]
      %v199 = vld [vmem:[%s173 + $0x70] sm:$0xff]
      %v200 = vld [vmem:[%s173 + $0x78] sm:$0xff]
      %v201 = vld [vmem:[%s1] sm:$0xff]
      %v202 = vld [vmem:[%s1 + $0x8] sm:$0xff]
      %v203 = vld [vmem:[%s1 + $0x10] sm:$0xff]
      %v204 = vld [vmem:[%s1 + $0x18] sm:$0xff]
      %v205 = vld [vmem:[%s1 + $0x20] sm:$0xff]
      %v206 = vld [vmem:[%s1 + $0x28] sm:$0xff]
      %v207 = vld [vmem:[%s1 + $0x30] sm:$0xff]
      %v208 = vld [vmem:[%s1 + $0x38] sm:$0xff]
      %v209 = vld [vmem:[%s1 + $0x40] sm:$0xff]
      %v210 = vld [vmem:[%s1 + $0x48] sm:$0xff]
      %v211 = vld [vmem:[%s1 + $0x50] sm:$0xff]
      %v212 = vld [vmem:[%s1 + $0x58] sm:$0xff]
      %v213 = vld [vmem:[%s1 + $0x60] sm:$0xff]
      %v214 = vld [vmem:[%s1 + $0x68] sm:$0xff]
      %v215 = vld [vmem:[%s1 + $0x70] sm:$0xff]
      %v216 = vld [vmem:[%s1 + $0x78] sm:$0xff]
      %217 = vmatprep.subr.mxu0 0.0
      %218 = vmatpush1.msra.mxu0 %v201
      %219 = vmatprep.subr.mxu0 0.0
      %220 = vmatpush1.msra.mxu0 %v202
      %221 = vmatprep.subr.mxu0 0.0
      %222 = vmatpush1.msra.mxu0 %v203
      %223 = vmatprep.subr.mxu0 0.0
      %224 = vmatpush1.msra.mxu0 %v204
      %225 = vmatprep.subr.mxu0 0.0
      %226 = vmatpush1.msra.mxu0 %v205
      %227 = vmatprep.subr.mxu0 0.0
      %228 = vmatpush1.msra.mxu0 %v206
      %229 = vmatprep.subr.mxu0 0.0
      %230 = vmatpush1.msra.mxu0 %v207
      %231 = vmatprep.subr.mxu0 0.0
      %232 = vmatpush1.msra.mxu0 %v208
      %233 = vmatprep.subr.mxu0 0.0
      %234 = vmatpush1.msra.mxu0 %v209
      %235 = vmatprep.subr.mxu0 0.0
      %236 = vmatpush1.msra.mxu0 %v210
      %237 = vmatprep.subr.mxu0 0.0
      %238 = vmatpush1.msra.mxu0 %v211
      %239 = vmatprep.subr.mxu0 0.0
      %240 = vmatpush1.msra.mxu0 %v212
      %241 = vmatprep.subr.mxu0 0.0
      %242 = vmatpush1.msra.mxu0 %v213
      %243 = vmatprep.subr.mxu0 0.0
      %244 = vmatpush1.msra.mxu0 %v214
      %245 = vmatprep.subr.mxu0 0.0
      %246 = vmatpush1.msra.mxu0 %v215
      %247 = vmatprep.subr.mxu0 0.0
      %248 = vmatpush1.msra.mxu0 %v216
      %249 = vmatprep.subr.mxu0 0.0
      %250 = vmatpush1.msra.mxu0 0.0
      %251 = vmatprep.subr.mxu0 0.0
      %252 = vmatpush1.msra.mxu0 0.0
      %253 = vmatprep.subr.mxu0 0.0
      %254 = vmatpush1.msra.mxu0 0.0
      %255 = vmatprep.subr.mxu0 0.0
      %256 = vmatpush1.msra.mxu0 0.0
      %257 = vmatprep.subr.mxu0 0.0
      %258 = vmatpush1.msra.mxu0 0.0
      %259 = vmatprep.subr.mxu0 0.0
      %260 = vmatpush1.msra.mxu0 0.0
      %261 = vmatprep.subr.mxu0 0.0
      %262 = vmatpush1.msra.mxu0 0.0
      %263 = vmatprep.subr.mxu0 0.0
      %264 = vmatpush1.msra.mxu0 0.0
      %265 = vmatprep.subr.mxu0 0.0
      %266 = vmatpush1.msra.mxu0 0.0
      %267 = vmatprep.subr.mxu0 0.0
      %268 = vmatpush1.msra.mxu0 0.0
      %269 = vmatprep.subr.mxu0 0.0
      %270 = vmatpush1.msra.mxu0 0.0
      %271 = vmatprep.subr.mxu0 0.0
      %272 = vmatpush1.msra.mxu0 0.0
      %273 = vmatprep.subr.mxu0 0.0
      %274 = vmatpush1.msra.mxu0 0.0
      %275 = vmatprep.subr.mxu0 0.0
      %276 = vmatpush1.msra.mxu0 0.0
      %277 = vmatprep.subr.mxu0 0.0
      %278 = vmatpush1.msra.mxu0 0.0
      %279 = vmatprep.subr.mxu0 0.0
      %280 = vmatpush1.msra.mxu0 0.0
      %281 = vmatprep.mubr.f32.mxu0 0.0
      %282 = vmatmul.mubr.f32.gmra.mrb[0].mxu0 %v185
      %v283 = vpop.f32.mrb[0].mxu0
      %v284 = vadd.f32 0.0, %v283
      %v285 = vpop.f32.mrb[0].mxu0
      %286 = vmatprep.mubr.f32.mxu0 0.0
      %287 = vmatmul.mubr.f32.gmra.mrb[0].mxu0 %v186
      %v288 = vpop.f32.mrb[0].mxu0
      %v289 = vadd.f32 0.0, %v288
      %v290 = vpop.f32.mrb[0].mxu0
      %291 = vmatprep.mubr.f32.mxu0 0.0
      %292 = vmatmul.mubr.f32.gmra.mrb[0].mxu0 %v187
      %v293 = vpop.f32.mrb[0].mxu0
      %v294 = vadd.f32 0.0, %v293
      %v295 = vpop.f32.mrb[0].mxu0
      %296 = vmatprep.mubr.f32.mxu0 0.0
      %297 = vmatmul.mubr.f32.gmra.mrb[0].mxu0 %v188
      %v298 = vpop.f32.mrb[0].mxu0
      %v299 = vadd.f32 0.0, %v298
      %v300 = vpop.f32.mrb[0].mxu0
      %301 = vmatprep.mubr.f32.mxu0 0.0
      %302 = vmatmul.mubr.f32.gmra.mrb[0].mxu0 %v189
      %v303 = vpop.f32.mrb[0].mxu0
      %v304 = vadd.f32 0.0, %v303
      %v305 = vpop.f32.mrb[0].mxu0
      %306 = vmatprep.mubr.f32.mxu0 0.0
      %307 = vmatmul.mubr.f32.gmra.mrb[0].mxu0 %v190
      %v308 = vpop.f32.mrb[0].mxu0
      %v309 = vadd.f32 0.0, %v308
      %v310 = vpop.f32.mrb[0].mxu0
      %311 = vmatprep.mubr.f32.mxu0 0.0
      %312 = vmatmul.mubr.f32.gmra.mrb[0].mxu0 %v191
      %v313 = vpop.f32.mrb[0].mxu0
      %v314 = vadd.f32 0.0, %v313
      %v315 = vpop.f32.mrb[0].mxu0
      %316 = vmatprep.mubr.f32.mxu0 0.0
      %317 = vmatmul.mubr.f32.gmra.mrb[0].mxu0 %v192
      %v318 = vpop.f32.mrb[0].mxu0
      %v319 = vadd.f32 0.0, %v318
      %v320 = vpop.f32.mrb[0].mxu0
      %321 = vmatprep.mubr.f32.mxu0 0.0
      %322 = vmatmul.mubr.f32.gmra.mrb[0].mxu0 %v193
      %v323 = vpop.f32.mrb[0].mxu0
      %v324 = vadd.f32 0.0, %v323
      %v325 = vpop.f32.mrb[0].mxu0
      %326 = vmatprep.mubr.f32.mxu0 0.0
      %327 = vmatmul.mubr.f32.gmra.mrb[0].mxu0 %v194
      %v328 = vpop.f32.mrb[0].mxu0
      %v329 = vadd.f32 0.0, %v328
      %v330 = vpop.f32.mrb[0].mxu0
      %331 = vmatprep.mubr.f32.mxu0 0.0
      %332 = vmatmul.mubr.f32.gmra.mrb[0].mxu0 %v195
      %v333 = vpop.f32.mrb[0].mxu0
      %v334 = vadd.f32 0.0, %v333
      %v335 = vpop.f32.mrb[0].mxu0
      %336 = vmatprep.mubr.f32.mxu0 0.0
      %337 = vmatmul.mubr.f32.gmra.mrb[0].mxu0 %v196
      %v338 = vpop.f32.mrb[0].mxu0
      %v339 = vadd.f32 0.0, %v338
      %v340 = vpop.f32.mrb[0].mxu0
      %341 = vmatprep.mubr.f32.mxu0 0.0
      %342 = vmatmul.mubr.f32.gmra.mrb[0].mxu0 %v197
      %v343 = vpop.f32.mrb[0].mxu0
      %v344 = vadd.f32 0.0, %v343
      %v345 = vpop.f32.mrb[0].mxu0
      %346 = vmatprep.mubr.f32.mxu0 0.0
      %347 = vmatmul.mubr.f32.gmra.mrb[0].mxu0 %v198
      %v348 = vpop.f32.mrb[0].mxu0
      %v349 = vadd.f32 0.0, %v348
      %v350 = vpop.f32.mrb[0].mxu0
      %351 = vmatprep.mubr.f32.mxu0 0.0
      %352 = vmatmul.mubr.f32.gmra.mrb[0].mxu0 %v199
      %v353 = vpop.f32.mrb[0].mxu0
      %v354 = vadd.f32 0.0, %v353
      %v355 = vpop.f32.mrb[0].mxu0
      %356 = vmatprep.mubr.f32.mxu0 0.0
      %357 = vmatmul.mubr.f32.gmra.mrb[0].mxu0 %v200
      %v358 = vpop.f32.mrb[0].mxu0
      %v359 = vadd.f32 0.0, %v358
      %v360 = vpop.f32.mrb[0].mxu0
      %361 = vdwg.mxu0
      %362 = vst [vmem:[%s179] sm:$0xff] %v284
      %363 = vst [vmem:[%s179 + $0x8] sm:$0xff] %v289
      %364 = vst [vmem:[%s179 + $0x10] sm:$0xff] %v294
      %365 = vst [vmem:[%s179 + $0x18] sm:$0xff] %v299
      %366 = vst [vmem:[%s179 + $0x20] sm:$0xff] %v304
      %367 = vst [vmem:[%s179 + $0x28] sm:$0xff] %v309
      %368 = vst [vmem:[%s179 + $0x30] sm:$0xff] %v314
      %369 = vst [vmem:[%s179 + $0x38] sm:$0xff] %v319
      %370 = vst [vmem:[%s179 + $0x40] sm:$0xff] %v324
      %371 = vst [vmem:[%s179 + $0x48] sm:$0xff] %v329
      %372 = vst [vmem:[%s179 + $0x50] sm:$0xff] %v334
      %373 = vst [vmem:[%s179 + $0x58] sm:$0xff] %v339
      %374 = vst [vmem:[%s179 + $0x60] sm:$0xff] %v344
      %375 = vst [vmem:[%s179 + $0x68] sm:$0xff] %v349
      %376 = vst [vmem:[%s179 + $0x70] sm:$0xff] %v354
      %377 = vst [vmem:[%s179 + $0x78] sm:$0xff] %v359
      %v378 = vadd.f32 %v284, %v289
      %v379 = vadd.f32 %v378, %v294
      %v380 = vadd.f32 %v379, %v299
      %v381 = vadd.f32 %v380, %v304
      %v382 = vadd.f32 %v381, %v309
      %v383 = vadd.f32 %v382, %v314
      %v384 = vadd.f32 %v383, %v319
      %v385 = vadd.f32 %v384, %v324
      %v386 = vadd.f32 %v385, %v329
      %v387 = vadd.f32 %v386, %v334
      %v388 = vadd.f32 %v387, %v339
      %v389 = vadd.f32 %v388, %v344
      %v390 = vadd.f32 %v389, %v349
      %v391 = vadd.f32 %v390, %v354
      %v392 = vadd.f32 %v391, %v359
      %v393 = vrot.slane %v392, 4
      %v394 = vadd.f32 %v392, %v393
      %v395 = vrot.slane %v394, 2
      %v396 = vadd.f32 %v394, %v395
      %v397 = vrot.slane %v396, 1
      %v398 = vadd.f32 %v396, %v397
      %v399 = vmul.f32 %v284, %v284
      %v400 = vmul.f32 %v289, %v289
      %v401 = vmul.f32 %v294, %v294
      %v402 = vmul.f32 %v299, %v299
      %v403 = vmul.f32 %v304, %v304
      %v404 = vmul.f32 %v309, %v309
      %v405 = vmul.f32 %v314, %v314
      %v406 = vmul.f32 %v319, %v319
      %v407 = vmul.f32 %v324, %v324
      %v408 = vmul.f32 %v329, %v329
      %v409 = vmul.f32 %v334, %v334
      %v410 = vmul.f32 %v339, %v339
      %v411 = vmul.f32 %v344, %v344
      %v412 = vmul.f32 %v349, %v349
      %v413 = vmul.f32 %v354, %v354
      %v414 = vmul.f32 %v359, %v359
      %v415 = vadd.f32 %v399, %v400
      %v416 = vadd.f32 %v415, %v401
      %v417 = vadd.f32 %v416, %v402
      %v418 = vadd.f32 %v417, %v403
      %v419 = vadd.f32 %v418, %v404
      %v420 = vadd.f32 %v419, %v405
      %v421 = vadd.f32 %v420, %v406
      %v422 = vadd.f32 %v421, %v407
      %v423 = vadd.f32 %v422, %v408
      %v424 = vadd.f32 %v423, %v409
      %v425 = vadd.f32 %v424, %v410
      %v426 = vadd.f32 %v425, %v411
      %v427 = vadd.f32 %v426, %v412
      %v428 = vadd.f32 %v427, %v413
      %v429 = vadd.f32 %v428, %v414
      %v430 = vrot.slane %v429, 4
      %v431 = vadd.f32 %v429, %v430
      %v432 = vrot.slane %v431, 2
      %v433 = vadd.f32 %v431, %v432
      %v434 = vrot.slane %v433, 1
      %v435 = vadd.f32 %v433, %v434
      %vm436 = vcmask 1040384
      %v437 = vsel %vm436, %v398, %v435
      %vm438 = vcmask 1041408
      %v439 = vsel %vm438, %v437, 0.0
      %440 = vst [vmem:[%s184] sm:$0xff] %v439
      %s441 = smul.u32 16, %s15
      %p442 = scmp.lt.s32.totalorder %s441, 63
      %s443 = scalar_select %p442, %s441, 63
      %s444 = smul.addr %s443, 8
      %s445 = scalar_lea.vmem %s2, %s444
      %p446 = scmp.lt.s32.totalorder %s15, 3
      %s447 = scalar_select %p446, %s15, 3
      %s448 = smul.addr %s447, 8
      %s449 = scalar_lea.vmem %s3, %s448
      // Predicated region
      $region29: #{x4_def_conv_block_forward.2} parent=27 // pred_check
        %p450 = pneg %p80
      $region30: #{x4_def_conv_block_forward.2} parent=27 // pred_check_branch
        %452 = sbr.rel (%p450) target = $region32
      $region31: #{x4_def_conv_block_forward.2} parent=27 // pred_region
        %s453 = smul.u32 16, %s15
      $region32: #{x4_def_conv_block_forward.2} parent=27 // pred_fallthru
        _
      // Predicated region
      $region33: #{x4_def_conv_block_forward.2} parent=27 // pred_check
        %p454 = pneg %p106
      $region34: #{x4_def_conv_block_forward.2} parent=27 // pred_check_branch
        %456 = sbr.rel (%p454) target = $region36
      $region35: #{x4_def_conv_block_forward.2} parent=27 // pred_region
        _
      $region36: #{x4_def_conv_block_forward.2} parent=27 // pred_fallthru
        _
    $region28: #{x4_def_conv_block_forward.2} parent=5 // pred_fallthru
      _
    %p457 = scmp.le.s32.totalorder 2, %s10
    // Predicated region
    $region37: #{x4_def_conv_block_forward.2} parent=5 // pred_check
      %p458 = pneg %p457
    $region38: #{x4_def_conv_block_forward.2} parent=5 // pred_check_branch
      %460 = sbr.rel (%p458) target = $region40
    $region39: #{x4_def_conv_block_forward.2} parent=5 // pred_region
      %s461 = ssub.s32 %s10, 2
      // Predicated region
      $region41: #{x4_def_conv_block_forward.2} parent=39 // pred_check
        %p462 = pneg %p86
      $region42: #{x4_def_conv_block_forward.2} parent=39 // pred_check_branch
        %464 = sbr.rel (%p462) target = $region44
      $region43: #{x4_def_conv_block_forward.2} parent=39 // pred_region
        %s465 = smul.u32 16, %s16
        %p466 = scmp.lt.s32.totalorder %s465, 63
        %s467 = scalar_select %p466, %s465, 63
        %s468 = smul.addr %s467, 8
        %s469 = scalar_lea.vmem %s2, %s468
      $region44: #{x4_def_conv_block_forward.2} parent=39 // pred_fallthru
        _
      // Predicated region
      $region45: #{x4_def_conv_block_forward.2} parent=39 // pred_check
        %p470 = pneg %p112
      $region46: #{x4_def_conv_block_forward.2} parent=39 // pred_check_branch
        %472 = sbr.rel (%p470) target = $region48
      $region47: #{x4_def_conv_block_forward.2} parent=39 // pred_region
        %p473 = scmp.lt.s32.totalorder %s16, 3
        %s474 = scalar_select %p473, %s16, 3
        %s475 = smul.addr %s474, 8
        %s476 = scalar_lea.vmem %s3, %s475
      $region48: #{x4_def_conv_block_forward.2} parent=39 // pred_fallthru
        _
    $region40: #{x4_def_conv_block_forward.2} parent=5 // pred_fallthru
      _
  $region6: #{x4_def_conv_block_forward.2} parent=0 // loop_footer
    %s14 = sadd.s32 1, %s10
  $region7: #{x4_def_conv_block_forward.2} parent=0 // loop_footer_branch
    %9 = sbr.rel target = $region3
  $region8: #{x4_def_conv_block_forward.2} parent=0 // loop_exit
    _

</llo_original>
